<compile_context>
chip_gen: v7x
topology: tpu7x:2x2x1
jax: 0.10.0
libtpu: 0.0.40
codegen_flags: <defaults>
</compile_context>

<pallas_src>
import functools

import jax
import jax.numpy as jnp
from jax import lax
from jax.experimental import pallas as pl
from jax.experimental.pallas import tpu as pltpu


def _round_up(x, m):
    return ((x + m - 1) // m) * m


def _sigmoid(x):
    # Single EUP tanh instead of exp + VPU divide; exact logistic identity.
    return 0.5 * jnp.tanh(0.5 * x) + 0.5


def _softplus(x):
    # Numerically stable: max(x, 0) + log(1 + exp(-|x|)); exp argument <= 0.
    return jnp.maximum(x, 0.0) + jnp.log(1.0 + jnp.exp(-jnp.abs(x)))


# --------------------------- fused forward kernel ---------------------------
def _make_fused_kernel(n_layers, num_heads, H, N, M):
    """Ref order (all whole-array, VMEM resident):

      x        (B, 400+n_out)        bf16   concat(flat image, label)
      w0       (400+n_out, 4H)       bf16   packed [i, f, g, o] layer-0 weight
      w_h_l    (H, 4H)               bf16   per layer l > 0
      wk_j     (H, M+2)              bf16   per head: key | beta | gate columns
      mem_init (N, M)                f32
      w_out    (H + nh*M, n_out_pad) bf16   rows [0:H]=h part, then per-head M
      slab     (R, seg_w)            f32    rows: layer biases, head biases,
                                            ||mem_init_n||^2, padded b_out
      out      (B, n_out_pad)        f32
    """

    def kernel(*refs):
        it = iter(refs)
        x_ref = next(it)
        w0_ref = next(it)
        wh_refs = [next(it) for _ in range(n_layers - 1)]
        wk_refs = [next(it) for _ in range(num_heads)]
        mem_ref = next(it)
        w_out_ref = next(it)
        slab_ref = next(it)
        out_ref = next(it)

        n_out_pad = out_ref.shape[1]
        inv_n = 1.0 / float(N)
        msq_row = n_layers + num_heads           # ||mem_init_n||^2 slab row
        bout_row = n_layers + num_heads + 1      # padded b_out slab row

        # ---- multi-layer LSTM controller, single step, h0 = c0 = 0 ----------
        # One packed lane-dense matmul per layer; gate order [i, f, g, o].
        # c0 == 0 => forget-gate term vanishes exactly; h0 == 0 => W_hh unused.
        def lstm_gates(pre):
            i_g = _sigmoid(pre[:, 0 * H:1 * H])
            g_g = jnp.tanh(pre[:, 2 * H:3 * H])
            o_g = _sigmoid(pre[:, 3 * H:4 * H])
            return o_g * jnp.tanh(i_g * g_g)

        pre = jnp.dot(x_ref[...], w0_ref[...],
                      preferred_element_type=jnp.float32)            # (B, 4H)
        pre = pre + slab_ref[0:1, :4 * H]
        h = lstm_gates(pre)
        for li in range(1, n_layers):
            pre = jnp.dot(h.astype(jnp.bfloat16), wh_refs[li - 1][...],
                          preferred_element_type=jnp.float32)
            pre = pre + slab_ref[li:li + 1, :4 * H]
            h = lstm_gates(pre)
        h_b = h.astype(jnp.bfloat16)

        # ---- output projection base: h @ W_out[:H] + b_out -------------------
        logits = (jnp.dot(h_b, w_out_ref[0:H, :],
                          preferred_element_type=jnp.float32)
                  + slab_ref[bout_row:bout_row + 1, :n_out_pad])

        # ---- LRUA heads: rank-1 write algebra (no (B, N, M) tensor) ----------
        mem0 = mem_ref[...]                                          # (N, M) f32
        msq0 = slab_ref[msq_row:msq_row + 1, :N]                     # (1, N)
        for j in range(num_heads):
            kv = jnp.dot(h_b, wk_refs[j][...],
                         preferred_element_type=jnp.float32)         # (B, M+2)
            kv = kv + slab_ref[n_layers + j:n_layers + j + 1, :M + 2]
            k = jnp.tanh(kv[:, :M])                                  # (B, M)
            beta = _softplus(kv[:, M:M + 1])                         # (B, 1)
            gate = _sigmoid(kv[:, M + 1:M + 2])                      # (B, 1)

            # Step-0 LRUA write weight: gate*prev_w_r + (1-gate)*w_lu with
            # prev_w_r == 0 and uniform w_lu => per-slot constant c = (1-g)/N,
            # i.e. mem_n = mem_init_n + c * k for every slot n (rank-1 update).
            c = (1.0 - gate) * inv_n                                 # (B, 1)
            kk = jnp.sum(k * k, axis=-1, keepdims=True)              # (B, 1)
            d0 = lax.dot_general(k, mem0, (((1,), (1,)), ((), ())),
                                 preferred_element_type=jnp.float32)  # (B, N)
            dots = d0 + c * kk                                       # mem_n . k
            msq = msq0 + 2.0 * c * d0 + (c * c) * kk                 # ||mem_n||^2
            sim = (dots * lax.rsqrt(kk + 1e-8)) * lax.rsqrt(msq + 1e-8)

            logit = beta * sim
            logit = logit - jnp.max(logit, axis=-1, keepdims=True)
            e = jnp.exp(logit)
            w_r = e * pl.reciprocal(jnp.sum(e, axis=-1, keepdims=True),
                                    approx=True)                     # (B, N)
            s = jnp.sum(w_r, axis=-1, keepdims=True)
            r = (jnp.dot(w_r, mem0, preferred_element_type=jnp.float32)
                 + (s * c) * k)                                      # (B, M)

            logits = logits + jnp.dot(
                r.astype(jnp.bfloat16),
                w_out_ref[H + j * M:H + (j + 1) * M, :],
                preferred_element_type=jnp.float32)

        out_ref[...] = _sigmoid(logits)

    return kernel


# ------------------------------ parameters ----------------------------------
def init_params(key, n_output, controller_size, controller_layers, num_heads, N, M):
    num_inputs = 400 + n_output
    ctrl_in = num_inputs + num_heads * M
    H = controller_size

    params = {"lstm": [], "heads": []}
    keys = iter(jax.random.split(key, 4 * controller_layers + 2 * num_heads + 4))

    def dense(k, fan_in, shape):
        return (jax.random.normal(k, shape, dtype=jnp.float32)
                / jnp.sqrt(jnp.float32(fan_in)))

    d_in = ctrl_in
    for _ in range(controller_layers):
        wih = dense(next(keys), d_in, (d_in, 4 * H))     # packed [i, f, g, o]
        whh = dense(next(keys), H, (H, 4 * H))           # unused on 1-step path
        b = dense(next(keys), H, (1, 4 * H)) * 0.1
        params["lstm"].append((wih, whh, b))
        d_in = H

    for _ in range(num_heads):
        wk = dense(next(keys), H, (H, M + 2))            # key | beta | gate
        bk = dense(next(keys), H, (1, M + 2)) * 0.1
        params["heads"].append((wk, bk))

    params["w_out"] = dense(next(keys), H + num_heads * M,
                            (H + num_heads * M, n_output))
    params["b_out"] = jnp.zeros((1, n_output), dtype=jnp.float32)
    params["mem_init"] = 1e-3 * jax.random.normal(next(keys), (N, M),
                                                  dtype=jnp.float32)
    params["r_init"] = jnp.zeros((num_heads * M,), dtype=jnp.float32)
    return params


# ------------------------------ forward pass --------------------------------
def one_shot_classifier_reduce_forward(params, images_t, label_t_1):
    B = images_t.shape[0]
    N, M = params["mem_init"].shape
    num_heads = len(params["heads"])
    n_layers = len(params["lstm"])
    H = params["lstm"][0][1].shape[0]
    n_output = params["b_out"].shape[-1]
    nhM = num_heads * M
    n_in = 400 + n_output
    n_out_pad = _round_up(n_output, 128)
    seg_w = max(_round_up(4 * H, 128), _round_up(M + 2, 128),
                _round_up(N, 128), n_out_pad)

    # images_t.view(-1, 400) + cat(label): one lane-dense controller operand.
    x = jnp.concatenate([images_t.reshape(B, 400), label_t_1],
                        axis=1).astype(jnp.bfloat16)                   # (B, n_in)
    args = [x]
    slab_rows = []

    # Layer 0: packed [i, f, g, o] input weight; the constant r_init read rows
    # are folded into the bias at trace time (recomputed on every trace — fine
    # while params are jit constants; revisit if params become traced args).
    wih0, _whh0, b0 = params["lstm"][0]
    b_eff0 = b0 + params["r_init"].reshape(1, nhM) @ wih0[n_in:, :]    # (1, 4H)
    args.append(wih0[:n_in, :].astype(jnp.bfloat16))                   # (n_in, 4H)
    slab_rows.append(jnp.pad(b_eff0, ((0, 0), (0, seg_w - 4 * H))))

    for li in range(1, n_layers):
        wih, _whh, b = params["lstm"][li]
        args.append(wih.astype(jnp.bfloat16))                          # (H, 4H)
        slab_rows.append(jnp.pad(b, ((0, 0), (0, seg_w - 4 * H))))

    for (wk, bk) in params["heads"]:
        args.append(wk.astype(jnp.bfloat16))                           # (H, M+2)
        slab_rows.append(jnp.pad(bk, ((0, 0), (0, seg_w - (M + 2)))))

    args.append(params["mem_init"])                                    # (N, M) f32

    # Output projection weight, lane-padded to a dense 128-wide output block.
    w_out = jnp.pad(params["w_out"], ((0, 0), (0, n_out_pad - n_output)))
    args.append(w_out.astype(jnp.bfloat16))                            # (H+nhM, 128)

    # Slab tail rows: ||mem_init_n||^2 (precomputed jit constant) and b_out.
    msq0 = jnp.sum(params["mem_init"] ** 2, axis=-1).reshape(1, N)
    slab_rows.append(jnp.pad(msq0, ((0, 0), (0, seg_w - N))))
    slab_rows.append(jnp.pad(params["b_out"],
                             ((0, 0), (0, seg_w - n_output))))
    args.append(jnp.concatenate(slab_rows, axis=0))                    # (R, seg_w)

    kernel = _make_fused_kernel(n_layers, num_heads, H, N, M)
    out = pl.pallas_call(
        kernel,
        out_shape=jax.ShapeDtypeStruct((B, n_out_pad), jnp.float32),
        in_specs=[pl.BlockSpec(memory_space=pltpu.MemorySpace.VMEM)
                  for _ in args],
        out_specs=pl.BlockSpec(memory_space=pltpu.MemorySpace.VMEM),
    )(*args)
    return out[:, :n_output]


# --------------------------------- main --------------------------------------
if __name__ == "__main__":
    n_output = 5
    controller_size = 32
    controller_layers = 1
    num_heads = 1
    N, M = 16, 16
    B = 2

    key = jax.random.PRNGKey(0)
    k_param, k_img, k_lbl = jax.random.split(key, 3)

    params = init_params(k_param, n_output, controller_size, controller_layers,
                         num_heads, N, M)

    images_t = jax.random.normal(k_img, (B, 20, 20), dtype=jnp.float32)
    labels = jax.random.randint(k_lbl, (B,), 0, n_output)
    label_t_1 = jax.nn.one_hot(labels, n_output, dtype=jnp.float32)

    fwd = jax.jit(functools.partial(one_shot_classifier_reduce_forward, params))
    result = fwd(images_t, label_t_1)
    jax.block_until_ready(result)

    assert result.shape == (B, n_output), result.shape
    assert bool(jnp.all(jnp.isfinite(result)))
    assert bool(jnp.all((result >= 0.0) & (result <= 1.0)))
    print("KERNEL_OK")
</pallas_src>

<mosaic_0001>
module attributes {stable_mosaic.version = 11 : i64} {
  func.func @kernel(%arg0: memref<2x405xbf16, #tpu.memory_space<vmem>>, %arg1: memref<405x128xbf16, #tpu.memory_space<vmem>>, %arg2: memref<32x18xbf16, #tpu.memory_space<vmem>>, %arg3: memref<16x16xf32, #tpu.memory_space<vmem>>, %arg4: memref<48x128xbf16, #tpu.memory_space<vmem>>, %arg5: memref<4x128xf32, #tpu.memory_space<vmem>>, %arg6: memref<2x128xf32, #tpu.memory_space<vmem>>) attributes {dimension_semantics = [], scalar_prefetch = 0 : i64, scratch_operands = 0 : i64, tpu.core_type = #tpu.core_type<tc>} {
    %c0 = arith.constant 0 : index
    %c0_0 = arith.constant 0 : index
    %0 = vector.load %arg0[%c0, %c0_0] : memref<2x405xbf16, #tpu.memory_space<vmem>>, vector<2x405xbf16>
    %c0_1 = arith.constant 0 : index
    %c0_2 = arith.constant 0 : index
    %1 = vector.load %arg1[%c0_1, %c0_2] : memref<405x128xbf16, #tpu.memory_space<vmem>>, vector<405x128xbf16>
    %cst = arith.constant dense<0.000000e+00> : vector<2x128xf32>
    %2 = tpu.matmul %0, %1, %cst {dimension_numbers = #tpu.dot_dimension_numbers<[1], [0], [0], [1], [0, 0, 1, 1], [], []>} : vector<2x405xbf16>, vector<405x128xbf16>, vector<2x128xf32> -> vector<2x128xf32>
    %c0_3 = arith.constant 0 : index
    %c0_4 = arith.constant 0 : index
    %3 = vector.load %arg5[%c0_3, %c0_4] : memref<4x128xf32, #tpu.memory_space<vmem>>, vector<1x128xf32>
    %4 = vector.broadcast %3 : vector<1x128xf32> to vector<2x128xf32>
    %5 = arith.addf %2, %4 : vector<2x128xf32>
    %6 = vector.extract_strided_slice %5 {offsets = [0, 0], sizes = [2, 32], strides = [1, 1]} : vector<2x128xf32> to vector<2x32xf32>
    %cst_5 = arith.constant 5.000000e-01 : f32
    %7 = vector.broadcast %cst_5 : f32 to vector<2x32xf32>
    %8 = arith.mulf %7, %6 : vector<2x32xf32>
    %9 = math.tanh %8 : vector<2x32xf32>
    %cst_6 = arith.constant 5.000000e-01 : f32
    %10 = vector.broadcast %cst_6 : f32 to vector<2x32xf32>
    %11 = arith.mulf %10, %9 : vector<2x32xf32>
    %cst_7 = arith.constant 5.000000e-01 : f32
    %12 = vector.broadcast %cst_7 : f32 to vector<2x32xf32>
    %13 = arith.addf %11, %12 : vector<2x32xf32>
    %14 = vector.extract_strided_slice %5 {offsets = [0, 64], sizes = [2, 32], strides = [1, 1]} : vector<2x128xf32> to vector<2x32xf32>
    %15 = math.tanh %14 : vector<2x32xf32>
    %16 = vector.extract_strided_slice %5 {offsets = [0, 96], sizes = [2, 32], strides = [1, 1]} : vector<2x128xf32> to vector<2x32xf32>
    %cst_8 = arith.constant 5.000000e-01 : f32
    %17 = vector.broadcast %cst_8 : f32 to vector<2x32xf32>
    %18 = arith.mulf %17, %16 : vector<2x32xf32>
    %19 = math.tanh %18 : vector<2x32xf32>
    %cst_9 = arith.constant 5.000000e-01 : f32
    %20 = vector.broadcast %cst_9 : f32 to vector<2x32xf32>
    %21 = arith.mulf %20, %19 : vector<2x32xf32>
    %cst_10 = arith.constant 5.000000e-01 : f32
    %22 = vector.broadcast %cst_10 : f32 to vector<2x32xf32>
    %23 = arith.addf %21, %22 : vector<2x32xf32>
    %24 = arith.mulf %13, %15 : vector<2x32xf32>
    %25 = math.tanh %24 : vector<2x32xf32>
    %26 = arith.mulf %23, %25 : vector<2x32xf32>
    %27 = arith.truncf %26 : vector<2x32xf32> to vector<2x32xbf16>
    %c0_11 = arith.constant 0 : index
    %c0_12 = arith.constant 0 : index
    %28 = vector.load %arg4[%c0_11, %c0_12] : memref<48x128xbf16, #tpu.memory_space<vmem>>, vector<32x128xbf16>
    %cst_13 = arith.constant dense<0.000000e+00> : vector<2x128xf32>
    %29 = tpu.matmul %27, %28, %cst_13 {dimension_numbers = #tpu.dot_dimension_numbers<[1], [0], [0], [1], [0, 0, 1, 1], [], []>} : vector<2x32xbf16>, vector<32x128xbf16>, vector<2x128xf32> -> vector<2x128xf32>
    %c3 = arith.constant 3 : index
    %c0_14 = arith.constant 0 : index
    %30 = vector.load %arg5[%c3, %c0_14] : memref<4x128xf32, #tpu.memory_space<vmem>>, vector<1x128xf32>
    %31 = vector.broadcast %30 : vector<1x128xf32> to vector<2x128xf32>
    %32 = arith.addf %29, %31 : vector<2x128xf32>
    %c0_15 = arith.constant 0 : index
    %c0_16 = arith.constant 0 : index
    %33 = vector.load %arg3[%c0_15, %c0_16] : memref<16x16xf32, #tpu.memory_space<vmem>>, vector<16x16xf32>
    %c2 = arith.constant 2 : index
    %c0_17 = arith.constant 0 : index
    %34 = vector.load %arg5[%c2, %c0_17] : memref<4x128xf32, #tpu.memory_space<vmem>>, vector<1x16xf32>
    %c0_18 = arith.constant 0 : index
    %c0_19 = arith.constant 0 : index
    %35 = vector.load %arg2[%c0_18, %c0_19] : memref<32x18xbf16, #tpu.memory_space<vmem>>, vector<32x18xbf16>
    %cst_20 = arith.constant dense<0.000000e+00> : vector<2x18xf32>
    %36 = tpu.matmul %27, %35, %cst_20 {dimension_numbers = #tpu.dot_dimension_numbers<[1], [0], [0], [1], [0, 0, 1, 1], [], []>} : vector<2x32xbf16>, vector<32x18xbf16>, vector<2x18xf32> -> vector<2x18xf32>
    %c1 = arith.constant 1 : index
    %c0_21 = arith.constant 0 : index
    %37 = vector.load %arg5[%c1, %c0_21] : memref<4x128xf32, #tpu.memory_space<vmem>>, vector<1x18xf32>
    %38 = vector.broadcast %37 : vector<1x18xf32> to vector<2x18xf32>
    %39 = arith.addf %36, %38 : vector<2x18xf32>
    %40 = vector.extract_strided_slice %39 {offsets = [0, 0], sizes = [2, 16], strides = [1, 1]} : vector<2x18xf32> to vector<2x16xf32>
    %41 = math.tanh %40 : vector<2x16xf32>
    %42 = vector.extract_strided_slice %39 {offsets = [0, 16], sizes = [2, 1], strides = [1, 1]} : vector<2x18xf32> to vector<2x1xf32>
    %cst_22 = arith.constant 0.000000e+00 : f32
    %43 = vector.broadcast %cst_22 : f32 to vector<2x1xf32>
    %44 = arith.maximumf %42, %43 : vector<2x1xf32>
    %45 = math.absf %42 : vector<2x1xf32>
    %cst_23 = arith.constant 0.000000e+00 : f32
    %46 = vector.broadcast %cst_23 : f32 to vector<2x1xf32>
    %47 = arith.subf %46, %45 : vector<2x1xf32>
    %48 = math.exp %47 : vector<2x1xf32>
    %cst_24 = arith.constant 1.000000e+00 : f32
    %49 = vector.broadcast %cst_24 : f32 to vector<2x1xf32>
    %50 = arith.addf %49, %48 : vector<2x1xf32>
    %51 = math.log %50 : vector<2x1xf32>
    %52 = arith.addf %44, %51 : vector<2x1xf32>
    %53 = vector.extract_strided_slice %39 {offsets = [0, 17], sizes = [2, 1], strides = [1, 1]} : vector<2x18xf32> to vector<2x1xf32>
    %cst_25 = arith.constant 5.000000e-01 : f32
    %54 = vector.broadcast %cst_25 : f32 to vector<2x1xf32>
    %55 = arith.mulf %54, %53 : vector<2x1xf32>
    %56 = math.tanh %55 : vector<2x1xf32>
    %cst_26 = arith.constant 5.000000e-01 : f32
    %57 = vector.broadcast %cst_26 : f32 to vector<2x1xf32>
    %58 = arith.mulf %57, %56 : vector<2x1xf32>
    %cst_27 = arith.constant 5.000000e-01 : f32
    %59 = vector.broadcast %cst_27 : f32 to vector<2x1xf32>
    %60 = arith.addf %58, %59 : vector<2x1xf32>
    %cst_28 = arith.constant 1.000000e+00 : f32
    %61 = vector.broadcast %cst_28 : f32 to vector<2x1xf32>
    %62 = arith.subf %61, %60 : vector<2x1xf32>
    %cst_29 = arith.constant 6.250000e-02 : f32
    %63 = vector.broadcast %cst_29 : f32 to vector<2x1xf32>
    %64 = arith.mulf %62, %63 : vector<2x1xf32>
    %65 = arith.mulf %41, %41 : vector<2x16xf32>
    %cst_30 = arith.constant dense<0.000000e+00> : vector<2xf32>
    %66 = vector.multi_reduction <add>, %65, %cst_30 [1] : vector<2x16xf32> to vector<2xf32>
    %67 = vector.shape_cast %66 : vector<2xf32> to vector<2x1xf32>
    %cst_31 = arith.constant dense<0.000000e+00> : vector<2x16xf32>
    %68 = tpu.matmul %41, %33, %cst_31 {dimension_numbers = #tpu.dot_dimension_numbers<[1], [1], [0], [0], [0, 0, 1, 0], [], []>} : vector<2x16xf32>, vector<16x16xf32>, vector<2x16xf32> -> vector<2x16xf32>
    %69 = arith.mulf %64, %67 : vector<2x1xf32>
    %70 = vector.broadcast %69 : vector<2x1xf32> to vector<2x16xf32>
    %71 = arith.addf %68, %70 : vector<2x16xf32>
    %cst_32 = arith.constant 2.000000e+00 : f32
    %72 = vector.broadcast %cst_32 : f32 to vector<2x1xf32>
    %73 = arith.mulf %72, %64 : vector<2x1xf32>
    %74 = vector.broadcast %73 : vector<2x1xf32> to vector<2x16xf32>
    %75 = arith.mulf %74, %68 : vector<2x16xf32>
    %76 = vector.broadcast %34 : vector<1x16xf32> to vector<2x16xf32>
    %77 = arith.addf %76, %75 : vector<2x16xf32>
    %78 = arith.mulf %64, %64 : vector<2x1xf32>
    %79 = arith.mulf %78, %67 : vector<2x1xf32>
    %80 = vector.broadcast %79 : vector<2x1xf32> to vector<2x16xf32>
    %81 = arith.addf %77, %80 : vector<2x16xf32>
    %cst_33 = arith.constant 9.99999993E-9 : f32
    %82 = vector.broadcast %cst_33 : f32 to vector<2x1xf32>
    %83 = arith.addf %67, %82 : vector<2x1xf32>
    %84 = math.rsqrt %83 : vector<2x1xf32>
    %85 = vector.broadcast %84 : vector<2x1xf32> to vector<2x16xf32>
    %86 = arith.mulf %71, %85 : vector<2x16xf32>
    %cst_34 = arith.constant 9.99999993E-9 : f32
    %87 = vector.broadcast %cst_34 : f32 to vector<2x16xf32>
    %88 = arith.addf %81, %87 : vector<2x16xf32>
    %89 = math.rsqrt %88 : vector<2x16xf32>
    %90 = arith.mulf %86, %89 : vector<2x16xf32>
    %91 = vector.broadcast %52 : vector<2x1xf32> to vector<2x16xf32>
    %92 = arith.mulf %91, %90 : vector<2x16xf32>
    %cst_35 = arith.constant dense<0xFF800000> : vector<2xf32>
    %93 = vector.multi_reduction <maximumf>, %92, %cst_35 [1] : vector<2x16xf32> to vector<2xf32>
    %94 = vector.shape_cast %93 : vector<2xf32> to vector<2x1xf32>
    %95 = vector.broadcast %94 : vector<2x1xf32> to vector<2x16xf32>
    %96 = arith.subf %92, %95 : vector<2x16xf32>
    %97 = math.exp %96 : vector<2x16xf32>
    %cst_36 = arith.constant dense<0.000000e+00> : vector<2xf32>
    %98 = vector.multi_reduction <add>, %97, %cst_36 [1] : vector<2x16xf32> to vector<2xf32>
    %99 = vector.shape_cast %98 : vector<2xf32> to vector<2x1xf32>
    %100 = tpu.reciprocal %99 {approx = true} : vector<2x1xf32> -> vector<2x1xf32>
    %101 = vector.broadcast %100 : vector<2x1xf32> to vector<2x16xf32>
    %102 = arith.mulf %97, %101 : vector<2x16xf32>
    %cst_37 = arith.constant dense<0.000000e+00> : vector<2xf32>
    %103 = vector.multi_reduction <add>, %102, %cst_37 [1] : vector<2x16xf32> to vector<2xf32>
    %104 = vector.shape_cast %103 : vector<2xf32> to vector<2x1xf32>
    %cst_38 = arith.constant dense<0.000000e+00> : vector<2x16xf32>
    %105 = tpu.matmul %102, %33, %cst_38 {dimension_numbers = #tpu.dot_dimension_numbers<[1], [0], [0], [1], [0, 0, 1, 1], [], []>} : vector<2x16xf32>, vector<16x16xf32>, vector<2x16xf32> -> vector<2x16xf32>
    %106 = arith.mulf %104, %64 : vector<2x1xf32>
    %107 = vector.broadcast %106 : vector<2x1xf32> to vector<2x16xf32>
    %108 = arith.mulf %107, %41 : vector<2x16xf32>
    %109 = arith.addf %105, %108 : vector<2x16xf32>
    %110 = arith.truncf %109 : vector<2x16xf32> to vector<2x16xbf16>
    %c32 = arith.constant 32 : index
    %c0_39 = arith.constant 0 : index
    %111 = vector.load %arg4[%c32, %c0_39] : memref<48x128xbf16, #tpu.memory_space<vmem>>, vector<16x128xbf16>
    %cst_40 = arith.constant dense<0.000000e+00> : vector<2x128xf32>
    %112 = tpu.matmul %110, %111, %cst_40 {dimension_numbers = #tpu.dot_dimension_numbers<[1], [0], [0], [1], [0, 0, 1, 1], [], []>} : vector<2x16xbf16>, vector<16x128xbf16>, vector<2x128xf32> -> vector<2x128xf32>
    %113 = arith.addf %32, %112 : vector<2x128xf32>
    %cst_41 = arith.constant 5.000000e-01 : f32
    %114 = vector.broadcast %cst_41 : f32 to vector<2x128xf32>
    %115 = arith.mulf %114, %113 : vector<2x128xf32>
    %116 = math.tanh %115 : vector<2x128xf32>
    %cst_42 = arith.constant 5.000000e-01 : f32
    %117 = vector.broadcast %cst_42 : f32 to vector<2x128xf32>
    %118 = arith.mulf %117, %116 : vector<2x128xf32>
    %cst_43 = arith.constant 5.000000e-01 : f32
    %119 = vector.broadcast %cst_43 : f32 to vector<2x128xf32>
    %120 = arith.addf %118, %119 : vector<2x128xf32>
    %c0_44 = arith.constant 0 : index
    %c0_45 = arith.constant 0 : index
    %121 = vector.load %arg6[%c0_44, %c0_45] : memref<2x128xf32, #tpu.memory_space<vmem>>, vector<2x128xf32>
    tpu.vector_store %arg6[%c0_44, %c0_45], %120 {strides = array<i32>} : memref<2x128xf32, #tpu.memory_space<vmem>>, vector<2x128xf32>,
    return
  }
}

</mosaic_0001>

<llo_original>
// kernel: one_shot_classifier_reduce_forward.1
$region0: #{one_shot_classifier_reduce_forward.1}
  #allocation0 [shape = 'u32[]', space=smem, size = 0x4, offset = 0x4, fixed_abs, tag = 'smem constant byte address 0x4 - core index']
  #allocation1 [shape = 'u32[144,128]{1,0:T(1,128)}', space=vmem, size = 0x12000, scoped, tag = 'internal scratch']
  %s0 = inlined_call_operand.vmem [shape: bf16[2,405], index: 0, kind: input, shape index: {}]
  %s1 = inlined_call_operand.hbm [shape: bf16[405,128], index: 1, kind: input, shape index: {}]
  %s2 = inlined_call_operand.vmem [shape: bf16[32,18], index: 2, kind: input, shape index: {}]
  %s3 = inlined_call_operand.vmem [shape: f32[16,16], index: 3, kind: input, shape index: {}]
  %s4 = inlined_call_operand.vmem [shape: bf16[48,128], index: 4, kind: input, shape index: {}]
  %s5 = inlined_call_operand.vmem [shape: f32[4,128], index: 5, kind: input, shape index: {}]
  %s6 = inlined_call_operand.hbm [shape: f32[2,128], index: 6, kind: output, shape index: {}]
  %s7 = sld [smem:[#allocation0]]
  $region38: #{one_shot_classifier_reduce_forward.1} parent=0
    _
  %s9 = ssub.s32 1, %s7
  %s10 = scalar_select 0, %s9, %s7
  $region1: #{one_shot_classifier_reduce_forward.1} parent=0
    #allocation2 [shape = 'u8[104448]{0}', space=vmem, size = 0x19800, scoped, tag = 'input window, operand 1, single buffered']
    #allocation3 [shape = 's32[1]{0}', space=sflag, size = 0x4, scoped, tag = 'scoped memory for one_shot_classifier_reduce_forward.1']
    #allocation4 [shape = 's32[1]{0}', space=sflag, size = 0x4, scoped, tag = 'scoped memory for one_shot_classifier_reduce_forward.1']
    #allocation5 [shape = 'u8[1024]{0}', space=vmem, size = 0x400, scoped, tag = 'output window, operand 0, single buffered']
    %11 = vsyncpa [#allocation3], 0
    %12 = vsyncpa [#allocation4], 0
    // Predicated region
    $region2: #{one_shot_classifier_reduce_forward.1} parent=1 // pred_check
      _
    $region3: #{one_shot_classifier_reduce_forward.1} parent=1 // pred_check_branch
      %14 = sbr.rel (0) target = $region5
    $region4: #{one_shot_classifier_reduce_forward.1} parent=1 // pred_region
      _
    $region5: #{one_shot_classifier_reduce_forward.1} parent=1 // pred_fallthru
      _
    // Predicated region
    $region6: #{one_shot_classifier_reduce_forward.1} parent=1 // pred_check
      _
    $region7: #{one_shot_classifier_reduce_forward.1} parent=1 // pred_check_branch
      %16 = sbr.rel (0) target = $region9
    $region8: #{one_shot_classifier_reduce_forward.1} parent=1 // pred_region
      %s18 = ssub.s32 3264, 3264
      %19 = vsyncadd [#allocation3], %s18
      %s20 = sshll.u32 [#allocation2], 4
      %s21 = int_to_ptr.vmem [resolvable:$true] %s20
      %26 = dma.hbm_to_vmem [thread:$0]  %s1, 3264, %s21, [#allocation3], 64, 64, 4
    $region9: #{one_shot_classifier_reduce_forward.1} parent=1 // pred_fallthru
      _
    // Predicated region
    $region10: #{one_shot_classifier_reduce_forward.1} parent=1 // pred_check
      _
    $region11: #{one_shot_classifier_reduce_forward.1} parent=1 // pred_check_branch
      %28 = sbr.rel (0) target = $region13
    $region12: #{one_shot_classifier_reduce_forward.1} parent=1 // pred_region
      _
    $region13: #{one_shot_classifier_reduce_forward.1} parent=1 // pred_fallthru
      _
    // Predicated region
    $region14: #{one_shot_classifier_reduce_forward.1} parent=1 // pred_check
      _
    $region15: #{one_shot_classifier_reduce_forward.1} parent=1 // pred_check_branch
      %30 = sbr.rel (0) target = $region17
    $region16: #{one_shot_classifier_reduce_forward.1} parent=1 // pred_region
      _
    $region17: #{one_shot_classifier_reduce_forward.1} parent=1 // pred_fallthru
      _
    // Predicated region
    $region18: #{one_shot_classifier_reduce_forward.1} parent=1 // pred_check
      _
    $region19: #{one_shot_classifier_reduce_forward.1} parent=1 // pred_check_branch
      %32 = sbr.rel (0) target = $region21
    $region20: #{one_shot_classifier_reduce_forward.1} parent=1 // pred_region
      _
    $region21: #{one_shot_classifier_reduce_forward.1} parent=1 // pred_fallthru
      _
    // Predicated region
    $region22: #{one_shot_classifier_reduce_forward.1} parent=1 // pred_check
      _
    $region23: #{one_shot_classifier_reduce_forward.1} parent=1 // pred_check_branch
      %34 = sbr.rel (0) target = $region25
    $region24: #{one_shot_classifier_reduce_forward.1} parent=1 // pred_region
      _
    $region25: #{one_shot_classifier_reduce_forward.1} parent=1 // pred_fallthru
      _
    // Predicated region
    $region26: #{one_shot_classifier_reduce_forward.1} parent=1 // pred_check
      _
    $region27: #{one_shot_classifier_reduce_forward.1} parent=1 // pred_check_branch
      %36 = sbr.rel (0) target = $region29
    $region28: #{one_shot_classifier_reduce_forward.1} parent=1 // pred_region
      %37 = dma.done [#allocation3], 3264
    $region29: #{one_shot_classifier_reduce_forward.1} parent=1 // pred_fallthru
      _
    %v39 = vld [vmem:[%s0] sm:$0xf]
    %v40 = vld [vmem:[#allocation2] sm:$0xf]
    %v41 = vld [vmem:[#allocation2 + $0x4] sm:$0xf]
    %v42 = vld [vmem:[#allocation2 + $0x8] sm:$0xf]
    %v43 = vld [vmem:[#allocation2 + $0xc] sm:$0xf]
    %v44 = vld [vmem:[#allocation2 + $0x10] sm:$0xf]
    %v45 = vld [vmem:[#allocation2 + $0x14] sm:$0xf]
    %v46 = vld [vmem:[#allocation2 + $0x18] sm:$0xf]
    %v47 = vld [vmem:[#allocation2 + $0x1c] sm:$0xf]
    %v48 = vld [vmem:[#allocation2 + $0x20] sm:$0xf]
    %v49 = vld [vmem:[#allocation2 + $0x24] sm:$0xf]
    %v50 = vld [vmem:[#allocation2 + $0x28] sm:$0xf]
    %v51 = vld [vmem:[#allocation2 + $0x2c] sm:$0xf]
    %v52 = vld [vmem:[#allocation2 + $0x30] sm:$0xf]
    %v53 = vld [vmem:[#allocation2 + $0x34] sm:$0xf]
    %v54 = vld [vmem:[#allocation2 + $0x38] sm:$0xf]
    %v55 = vld [vmem:[#allocation2 + $0x3c] sm:$0xf]
    %v56 = vld [vmem:[#allocation2 + $0x40] sm:$0xf]
    %v57 = vld [vmem:[#allocation2 + $0x44] sm:$0xf]
    %v58 = vld [vmem:[#allocation2 + $0x48] sm:$0xf]
    %v59 = vld [vmem:[#allocation2 + $0x4c] sm:$0xf]
    %v60 = vld [vmem:[#allocation2 + $0x50] sm:$0xf]
    %v61 = vld [vmem:[#allocation2 + $0x54] sm:$0xf]
    %v62 = vld [vmem:[#allocation2 + $0x58] sm:$0xf]
    %v63 = vld [vmem:[#allocation2 + $0x5c] sm:$0xf]
    %v64 = vld [vmem:[#allocation2 + $0x60] sm:$0xf]
    %v65 = vld [vmem:[#allocation2 + $0x64] sm:$0xf]
    %v66 = vld [vmem:[#allocation2 + $0x68] sm:$0xf]
    %v67 = vld [vmem:[#allocation2 + $0x6c] sm:$0xf]
    %v68 = vld [vmem:[#allocation2 + $0x70] sm:$0xf]
    %v69 = vld [vmem:[#allocation2 + $0x74] sm:$0xf]
    %v70 = vld [vmem:[#allocation2 + $0x78] sm:$0xf]
    %v71 = vld [vmem:[#allocation2 + $0x7c] sm:$0xf]
    %v72 = vld [vmem:[#allocation2 + $0x80] sm:$0xf]
    %v73 = vld [vmem:[#allocation2 + $0x84] sm:$0xf]
    %v74 = vld [vmem:[#allocation2 + $0x88] sm:$0xf]
    %v75 = vld [vmem:[#allocation2 + $0x8c] sm:$0xf]
    %v76 = vld [vmem:[#allocation2 + $0x90] sm:$0xf]
    %v77 = vld [vmem:[#allocation2 + $0x94] sm:$0xf]
    %v78 = vld [vmem:[#allocation2 + $0x98] sm:$0xf]
    %v79 = vld [vmem:[#allocation2 + $0x9c] sm:$0xf]
    %v80 = vld [vmem:[#allocation2 + $0xa0] sm:$0xf]
    %v81 = vld [vmem:[#allocation2 + $0xa4] sm:$0xf]
    %v82 = vld [vmem:[#allocation2 + $0xa8] sm:$0xf]
    %v83 = vld [vmem:[#allocation2 + $0xac] sm:$0xf]
    %v84 = vld [vmem:[#allocation2 + $0xb0] sm:$0xf]
    %v85 = vld [vmem:[#allocation2 + $0xb4] sm:$0xf]
    %v86 = vld [vmem:[#allocation2 + $0xb8] sm:$0xf]
    %v87 = vld [vmem:[#allocation2 + $0xbc] sm:$0xf]
    %v88 = vld [vmem:[#allocation2 + $0xc0] sm:$0xf]
    %v89 = vld [vmem:[#allocation2 + $0xc4] sm:$0xf]
    %v90 = vld [vmem:[#allocation2 + $0xc8] sm:$0x7]
    %v91 = vld [vmem:[%s5] sm:$0x1]
    %v92 = vlaneseq
    %v93 = vshrl.u32 %v92, 7
    %v94 = vsub.s32 0, %v93
    %v95 = vrot.slane %v91, %v94
    %v98 = vunpack.c.l.s4 1966171168
    %v99 = vunpack.c.0.s8 %v98
    %v100 = vlaneseq
    %v101 = vshrl.u32 %v100, 7
    %v102 = vsub.s32 %v99, %v101
    %v103 = vrot.slane %v39, %v102
    %v104 = vcombine.high %v103, %v103
    %v106 = vunpack.c.l.s4 1966171168
    %v107 = vunpack.c.0.s8 %v106
    %v108 = vlaneseq
    %v109 = vshrl.u32 %v108, 7
    %v110 = vsub.s32 %v107, %v109
    %v111 = vrot.slane %v103, %v110
    %v113 = vunpack.c.l.s4 1966171168
    %v114 = vunpack.c.0.s8 %v113
    %v115 = vlaneseq
    %v116 = vshrl.u32 %v115, 7
    %v117 = vsub.s32 %v114, %v116
    %v118 = vrot.slane %v104, %v117
    %v119 = vcombine.high %v111, %v111
    %v120 = vcombine.high %v118, %v118
    %v175 = vunpack.c.l.b16 %v40
    %v176 = vunpack.c.l.b16 %v41
    %v177 = vunpack.c.l.b16 %v42
    %v178 = vunpack.c.l.b16 %v43
    %v179 = vunpack.c.l.b16 %v44
    %v180 = vunpack.c.l.b16 %v45
    %v181 = vunpack.c.l.b16 %v46
    %v182 = vunpack.c.l.b16 %v47
    %v183 = vunpack.c.l.b16 %v48
    %v184 = vunpack.c.l.b16 %v49
    %v185 = vunpack.c.l.b16 %v50
    %v186 = vunpack.c.l.b16 %v51
    %v187 = vunpack.c.l.b16 %v52
    %v188 = vunpack.c.l.b16 %v53
    %v189 = vunpack.c.l.b16 %v54
    %v190 = vunpack.c.l.b16 %v55
    %v191 = vunpack.c.l.b16 %v56
    %v192 = vunpack.c.l.b16 %v57
    %v193 = vunpack.c.l.b16 %v58
    %v194 = vunpack.c.l.b16 %v59
    %v195 = vunpack.c.l.b16 %v60
    %v196 = vunpack.c.l.b16 %v61
    %v197 = vunpack.c.l.b16 %v62
    %v198 = vunpack.c.l.b16 %v63
    %v199 = vunpack.c.l.b16 %v64
    %v200 = vunpack.c.l.b16 %v65
    %v201 = vunpack.c.l.b16 %v66
    %v202 = vunpack.c.l.b16 %v67
    %v203 = vunpack.c.l.b16 %v68
    %v204 = vunpack.c.l.b16 %v69
    %v205 = vunpack.c.l.b16 %v70
    %v206 = vunpack.c.l.b16 %v71
    %v207 = vunpack.c.l.b16 %v72
    %v208 = vunpack.c.l.b16 %v73
    %v209 = vunpack.c.l.b16 %v74
    %v210 = vunpack.c.l.b16 %v75
    %v211 = vunpack.c.l.b16 %v76
    %v212 = vunpack.c.l.b16 %v77
    %v213 = vunpack.c.l.b16 %v78
    %v214 = vunpack.c.l.b16 %v79
    %v215 = vunpack.c.l.b16 %v80
    %v216 = vunpack.c.l.b16 %v81
    %v217 = vunpack.c.l.b16 %v82
    %v218 = vunpack.c.l.b16 %v83
    %v219 = vunpack.c.l.b16 %v84
    %v220 = vunpack.c.l.b16 %v85
    %v221 = vunpack.c.l.b16 %v86
    %v222 = vunpack.c.l.b16 %v87
    %v223 = vunpack.c.l.b16 %v88
    %v224 = vunpack.c.l.b16 %v89
    %v225 = vunpack.c.l.b16 %v90
    %v226 = vpack.c.b16 %v176, %v175
    %v227 = vpack.c.b16 %v178, %v177
    %v228 = vpack.c.b16 %v180, %v179
    %v229 = vpack.c.b16 %v182, %v181
    %v230 = vpack.c.b16 %v184, %v183
    %v231 = vpack.c.b16 %v186, %v185
    %v232 = vpack.c.b16 %v188, %v187
    %v233 = vpack.c.b16 %v190, %v189
    %v234 = vpack.c.b16 %v192, %v191
    %v235 = vpack.c.b16 %v194, %v193
    %v236 = vpack.c.b16 %v196, %v195
    %v237 = vpack.c.b16 %v198, %v197
    %v238 = vpack.c.b16 %v200, %v199
    %v239 = vpack.c.b16 %v202, %v201
    %v240 = vpack.c.b16 %v204, %v203
    %v241 = vpack.c.b16 %v206, %v205
    %v242 = vpack.c.b16 %v208, %v207
    %v243 = vpack.c.b16 %v210, %v209
    %v244 = vpack.c.b16 %v212, %v211
    %v245 = vpack.c.b16 %v214, %v213
    %v246 = vpack.c.b16 %v216, %v215
    %v247 = vpack.c.b16 %v218, %v217
    %v248 = vpack.c.b16 %v220, %v219
    %v249 = vpack.c.b16 %v222, %v221
    %v250 = vpack.c.b16 %v224, %v223
    %v251 = vpack.c.b16 %v225, %v225
    %vm277 = vcmask 171008
    %v279 = vsel %vm277, %v120, 0
    %vm281 = vcmask 1041408
    %vm282 = vcmask 1042432
    %v283 = vsel %vm281, 4294967295, 65535
    %v284 = vsel %vm282, %v283, 0
    %v286 = vand.u32 %v251, %v284
    %288 = vmatprep.subr.bf16.mxu0 0
    %289 = vmatpush1.bf16.msra.mxu0 %v226
    %290 = vmatprep.subr.bf16.mxu0 0
    %291 = vmatpush1.bf16.msra.mxu0 %v227
    %292 = vmatprep.subr.bf16.mxu0 0
    %293 = vmatpush1.bf16.msra.mxu0 %v228
    %294 = vmatprep.subr.bf16.mxu0 0
    %295 = vmatpush1.bf16.msra.mxu0 %v229
    %296 = vmatprep.subr.bf16.mxu0 0
    %297 = vmatpush1.bf16.msra.mxu0 %v230
    %298 = vmatprep.subr.bf16.mxu0 0
    %299 = vmatpush1.bf16.msra.mxu0 %v231
    %300 = vmatprep.subr.bf16.mxu0 0
    %301 = vmatpush1.bf16.msra.mxu0 %v232
    %302 = vmatprep.subr.bf16.mxu0 0
    %303 = vmatpush1.bf16.msra.mxu0 %v233
    %304 = vmatprep.subr.bf16.mxu0 0
    %305 = vmatpush1.bf16.msra.mxu0 %v234
    %306 = vmatprep.subr.bf16.mxu0 0
    %307 = vmatpush1.bf16.msra.mxu0 %v235
    %308 = vmatprep.subr.bf16.mxu0 0
    %309 = vmatpush1.bf16.msra.mxu0 %v236
    %310 = vmatprep.subr.bf16.mxu0 0
    %311 = vmatpush1.bf16.msra.mxu0 %v237
    %312 = vmatprep.subr.bf16.mxu0 0
    %313 = vmatpush1.bf16.msra.mxu0 %v238
    %314 = vmatprep.subr.bf16.mxu0 0
    %315 = vmatpush1.bf16.msra.mxu0 %v239
    %316 = vmatprep.subr.bf16.mxu0 0
    %317 = vmatpush1.bf16.msra.mxu0 %v240
    %318 = vmatprep.subr.bf16.mxu0 0
    %319 = vmatpush1.bf16.msra.mxu0 %v241
    %320 = vmatprep.mubr.bf16.mxu0 %v118
    %321 = vmatmul.mubr.bf16.gmra.mrb[0].mxu0 %v111
    %v322 = vpop.f32.mrb[0].mxu0
    %v323 = vadd.f32 %v95, %v322
    %v324 = vpop.f32.mrb[0].mxu0
    %v325 = vpop.f32.mrb[0].mxu0
    %v326 = vpop.f32.mrb[0].mxu0
    %327 = vdwg.mxu0
    %328 = vmatprep.subr.bf16.mxu0 0
    %329 = vmatpush1.bf16.msra.mxu0 %v242
    %330 = vmatprep.subr.bf16.mxu0 0
    %331 = vmatpush1.bf16.msra.mxu0 %v243
    %332 = vmatprep.subr.bf16.mxu0 0
    %333 = vmatpush1.bf16.msra.mxu0 %v244
    %334 = vmatprep.subr.bf16.mxu0 0
    %335 = vmatpush1.bf16.msra.mxu0 %v245
    %336 = vmatprep.subr.bf16.mxu0 0
    %337 = vmatpush1.bf16.msra.mxu0 %v246
    %338 = vmatprep.subr.bf16.mxu0 0
    %339 = vmatpush1.bf16.msra.mxu0 %v247
    %340 = vmatprep.subr.bf16.mxu0 0
    %341 = vmatpush1.bf16.msra.mxu0 %v248
    %342 = vmatprep.subr.bf16.mxu0 0
    %343 = vmatpush1.bf16.msra.mxu0 %v249
    %344 = vmatprep.subr.bf16.mxu0 0
    %345 = vmatpush1.bf16.msra.mxu0 %v250
    %346 = vmatprep.subr.bf16.mxu0 0
    %347 = vmatpush1.bf16.msra.mxu0 %v286
    %348 = vmatprep.subr.bf16.mxu0 0
    %349 = vmatpush1.bf16.msra.mxu0 0
    %350 = vmatprep.subr.bf16.mxu0 0
    %351 = vmatpush1.bf16.msra.mxu0 0
    %352 = vmatprep.subr.bf16.mxu0 0
    %353 = vmatpush1.bf16.msra.mxu0 0
    %354 = vmatprep.subr.bf16.mxu0 0
    %355 = vmatpush1.bf16.msra.mxu0 0
    %356 = vmatprep.subr.bf16.mxu0 0
    %357 = vmatpush1.bf16.msra.mxu0 0
    %358 = vmatprep.subr.bf16.mxu0 0
    %359 = vmatpush1.bf16.msra.mxu0 0
    %360 = vmatprep.mubr.bf16.mxu0 %v279
    %361 = vmatmul.mubr.bf16.gmra.mrb[0].mxu0 %v119
    %v362 = vpop.f32.mrb[0].mxu0
    %v363 = vadd.f32 %v323, %v362
    %v364 = vpop.f32.mrb[0].mxu0
    %v365 = vpop.f32.mrb[0].mxu0
    %v366 = vpop.f32.mrb[0].mxu0
    %367 = vdwg.mxu0
    %v368 = vmul.f32 %v363, 0.5
    %v369 = vtanh.pop %v368
    %v370 = vmul.f32 %v369, 0.5
    %v371 = vadd.f32 %v370, 0.5
    %v372 = vtanh.pop %v363
    %374 = vrot.lane.b32.xlu0 %v372, 64
    %v375 = vpop.permute.xlu0 %374
    %v377 = vmul.f32 %v371, %v375
    %v378 = vtanh.pop %v377
    %380 = vrot.lane.b32.xlu0 %v378, 96
    %v381 = vpop.permute.xlu0 %380
    %v383 = vmul.f32 %v371, %v381
    %v384 = vpack.c.bf16 %v383, %v383
    %v385 = vld [vmem:[%s4] sm:$0xf]
    %v386 = vld [vmem:[%s4 + $0x4] sm:$0xf]
    %v387 = vld [vmem:[%s4 + $0x8] sm:$0xf]
    %v388 = vld [vmem:[%s4 + $0xc] sm:$0xf]
    %v389 = vld [vmem:[%s5 + $0x3] sm:$0x1]
    %v390 = vlaneseq
    %v391 = vshrl.u32 %v390, 7
    %v392 = vsub.s32 0, %v391
    %v393 = vrot.slane %v389, %v392
    %395 = vrot.lane.b32.xlu0 %v384, 32
    %v396 = vpop.permute.xlu0 %395
    %v401 = vunpack.c.l.b16 %v385
    %v402 = vunpack.c.l.b16 %v386
    %v403 = vunpack.c.l.b16 %v387
    %v404 = vunpack.c.l.b16 %v388
    %v405 = vpack.c.b16 %v402, %v401
    %v406 = vpack.c.b16 %v404, %v403
    %vm409 = vcmask 261120
    %v411 = vsel %vm409, %v396, 0
    %413 = vmatprep.subr.bf16.mxu0 0
    %414 = vmatpush1.bf16.msra.mxu0 %v405
    %415 = vmatprep.subr.bf16.mxu0 0
    %416 = vmatpush1.bf16.msra.mxu0 %v406
    %417 = vmatprep.subr.bf16.mxu0 0
    %418 = vmatpush1.bf16.msra.mxu0 0
    %419 = vmatprep.subr.bf16.mxu0 0
    %420 = vmatpush1.bf16.msra.mxu0 0
    %421 = vmatprep.subr.bf16.mxu0 0
    %422 = vmatpush1.bf16.msra.mxu0 0
    %423 = vmatprep.subr.bf16.mxu0 0
    %424 = vmatpush1.bf16.msra.mxu0 0
    %425 = vmatprep.subr.bf16.mxu0 0
    %426 = vmatpush1.bf16.msra.mxu0 0
    %427 = vmatprep.subr.bf16.mxu0 0
    %428 = vmatpush1.bf16.msra.mxu0 0
    %429 = vmatprep.subr.bf16.mxu0 0
    %430 = vmatpush1.bf16.msra.mxu0 0
    %431 = vmatprep.subr.bf16.mxu0 0
    %432 = vmatpush1.bf16.msra.mxu0 0
    %433 = vmatprep.subr.bf16.mxu0 0
    %434 = vmatpush1.bf16.msra.mxu0 0
    %435 = vmatprep.subr.bf16.mxu0 0
    %436 = vmatpush1.bf16.msra.mxu0 0
    %437 = vmatprep.subr.bf16.mxu0 0
    %438 = vmatpush1.bf16.msra.mxu0 0
    %439 = vmatprep.subr.bf16.mxu0 0
    %440 = vmatpush1.bf16.msra.mxu0 0
    %441 = vmatprep.subr.bf16.mxu0 0
    %442 = vmatpush1.bf16.msra.mxu0 0
    %443 = vmatprep.subr.bf16.mxu0 0
    %444 = vmatpush1.bf16.msra.mxu0 0
    %445 = vmatprep.mubr.bf16.mxu0 0
    %446 = vmatmul.mubr.bf16.gmra.mrb[0].mxu0 %v411
    %v447 = vpop.f32.mrb[0].mxu0
    %v448 = vadd.f32 %v393, %v447
    %v449 = vpop.f32.mrb[0].mxu0
    %v450 = vpop.f32.mrb[0].mxu0
    %v451 = vpop.f32.mrb[0].mxu0
    %452 = vdwg.mxu0
    %v453 = vld [vmem:[%s3] sm:$0xff]
    %v454 = vld [vmem:[%s3 + $0x8] sm:$0xff]
    %v455 = vld [vmem:[%s5 + $0x2] sm:$0x1]
    %v456 = vld [vmem:[%s2] sm:$0xf]
    %v457 = vld [vmem:[%s2 + $0x4] sm:$0xf]
    %v458 = vld [vmem:[%s2 + $0x8] sm:$0xf]
    %v459 = vld [vmem:[%s2 + $0xc] sm:$0xf]
    %v460 = vld [vmem:[%s5 + $0x1] sm:$0x1]
    %v461 = vlaneseq
    %v462 = vshrl.u32 %v461, 7
    %v463 = vsub.s32 0, %v462
    %v464 = vrot.slane %v460, %v463
    %v469 = vunpack.c.l.b16 %v456
    %v470 = vunpack.c.l.b16 %v457
    %v471 = vunpack.c.l.b16 %v458
    %v472 = vunpack.c.l.b16 %v459
    %v473 = vpack.c.b16 %v470, %v469
    %v474 = vpack.c.b16 %v472, %v471
    %477 = vmatprep.subr.bf16.mxu0 0
    %478 = vmatpush1.bf16.msra.mxu0 %v473
    %479 = vmatprep.subr.bf16.mxu0 0
    %480 = vmatpush1.bf16.msra.mxu0 %v474
    %481 = vmatprep.subr.bf16.mxu0 0
    %482 = vmatpush1.bf16.msra.mxu0 0
    %483 = vmatprep.subr.bf16.mxu0 0
    %484 = vmatpush1.bf16.msra.mxu0 0
    %485 = vmatprep.subr.bf16.mxu0 0
    %486 = vmatpush1.bf16.msra.mxu0 0
    %487 = vmatprep.subr.bf16.mxu0 0
    %488 = vmatpush1.bf16.msra.mxu0 0
    %489 = vmatprep.subr.bf16.mxu0 0
    %490 = vmatpush1.bf16.msra.mxu0 0
    %491 = vmatprep.subr.bf16.mxu0 0
    %492 = vmatpush1.bf16.msra.mxu0 0
    %493 = vmatprep.subr.bf16.mxu0 0
    %494 = vmatpush1.bf16.msra.mxu0 0
    %495 = vmatprep.subr.bf16.mxu0 0
    %496 = vmatpush1.bf16.msra.mxu0 0
    %497 = vmatprep.subr.bf16.mxu0 0
    %498 = vmatpush1.bf16.msra.mxu0 0
    %499 = vmatprep.subr.bf16.mxu0 0
    %500 = vmatpush1.bf16.msra.mxu0 0
    %501 = vmatprep.subr.bf16.mxu0 0
    %502 = vmatpush1.bf16.msra.mxu0 0
    %503 = vmatprep.subr.bf16.mxu0 0
    %504 = vmatpush1.bf16.msra.mxu0 0
    %505 = vmatprep.subr.bf16.mxu0 0
    %506 = vmatpush1.bf16.msra.mxu0 0
    %507 = vmatprep.subr.bf16.mxu0 0
    %508 = vmatpush1.bf16.msra.mxu0 0
    %509 = vmatprep.mubr.bf16.mxu0 0
    %510 = vmatmul.mubr.bf16.gmra.mrb[0].mxu0 %v411
    %v511 = vpop.f32.mrb[0].mxu0
    %v512 = vadd.f32 %v464, %v511
    %v513 = vpop.f32.mrb[0].mxu0
    %v514 = vpop.f32.mrb[0].mxu0
    %v515 = vpop.f32.mrb[0].mxu0
    %516 = vdwg.mxu0
    %v517 = vtanh.pop %v512
    %v518 = vmax.f32 %v512, 0.0
    %v519 = vand.u32 2147483647, %v512
    %v520 = vsub.f32 0.0, %v519
    %v521 = vmul.f32 %v520, 1.442695
    %v522 = vpow.pop %v521
    %v523 = vadd.f32 %v522, 1.0
    %v524 = vlog2.pop %v523
    %v525 = vmul.f32 %v524, 0.6931472
    %v526 = vadd.f32 %v518, %v525
    %v527 = vmul.f32 %v512, 0.5
    %v528 = vtanh.pop %v527
    %v529 = vmul.f32 %v528, 0.5
    %v530 = vadd.f32 %v529, 0.5
    %v531 = vsub.f32 1.0, %v530
    %v532 = vmul.f32 %v531, 0.0625
    %v533 = vmul.f32 %v517, %v517
    %vm534 = vcmask 123904
    %v535 = vsel %vm534, %v533, 0.0
    %536 = vadd.xlane.f32.xlu0 %v535
    %v537 = vpop.xlane.xlu0 %536
    %vm538 = vcmask 130048
    %v540 = vsel %vm538, %v517, 0
    %v543 = vsel %vm538, %v453, 0
    %v546 = vsel %vm538, %v454, 0
    %548 = vmatprep.subr.mxu0 0.0
    %549 = vmatpush1.xpose.msra.mxu0 %v543
    %550 = vmatprep.subr.mxu0 0.0
    %551 = vmatpush1.xpose.msra.mxu0 %v546
    %552 = vmatprep.subr.mxu0 0.0
    %553 = vmatpush1.xpose.msra.mxu0 0.0
    %554 = vmatprep.subr.mxu0 0.0
    %555 = vmatpush1.xpose.msra.mxu0 0.0
    %556 = vmatprep.subr.mxu0 0.0
    %557 = vmatpush1.xpose.msra.mxu0 0.0
    %558 = vmatprep.subr.mxu0 0.0
    %559 = vmatpush1.xpose.msra.mxu0 0.0
    %560 = vmatprep.subr.mxu0 0.0
    %561 = vmatpush1.xpose.msra.mxu0 0.0
    %562 = vmatprep.subr.mxu0 0.0
    %563 = vmatpush1.xpose.msra.mxu0 0.0
    %564 = vmatprep.subr.mxu0 0.0
    %565 = vmatpush1.xpose.msra.mxu0 0.0
    %566 = vmatprep.subr.mxu0 0.0
    %567 = vmatpush1.xpose.msra.mxu0 0.0
    %568 = vmatprep.subr.mxu0 0.0
    %569 = vmatpush1.xpose.msra.mxu0 0.0
    %570 = vmatprep.subr.mxu0 0.0
    %571 = vmatpush1.xpose.msra.mxu0 0.0
    %572 = vmatprep.subr.mxu0 0.0
    %573 = vmatpush1.xpose.msra.mxu0 0.0
    %574 = vmatprep.subr.mxu0 0.0
    %575 = vmatpush1.xpose.msra.mxu0 0.0
    %576 = vmatprep.subr.mxu0 0.0
    %577 = vmatpush1.xpose.msra.mxu0 0.0
    %578 = vmatprep.subr.mxu0 0.0
    %579 = vmatpush1.xpose.msra.mxu0 0.0
    %580 = vmatprep.subr.mxu0 0.0
    %581 = vmatpush1.xpose.msra.mxu0 0.0
    %582 = vmatprep.subr.mxu0 0.0
    %583 = vmatpush1.xpose.msra.mxu0 0.0
    %584 = vmatprep.subr.mxu0 0.0
    %585 = vmatpush1.xpose.msra.mxu0 0.0
    %586 = vmatprep.subr.mxu0 0.0
    %587 = vmatpush1.xpose.msra.mxu0 0.0
    %588 = vmatprep.subr.mxu0 0.0
    %589 = vmatpush1.xpose.msra.mxu0 0.0
    %590 = vmatprep.subr.mxu0 0.0
    %591 = vmatpush1.xpose.msra.mxu0 0.0
    %592 = vmatprep.subr.mxu0 0.0
    %593 = vmatpush1.xpose.msra.mxu0 0.0
    %594 = vmatprep.subr.mxu0 0.0
    %595 = vmatpush1.xpose.msra.mxu0 0.0
    %596 = vmatprep.subr.mxu0 0.0
    %597 = vmatpush1.xpose.msra.mxu0 0.0
    %598 = vmatprep.subr.mxu0 0.0
    %599 = vmatpush1.xpose.msra.mxu0 0.0
    %600 = vmatprep.subr.mxu0 0.0
    %601 = vmatpush1.xpose.msra.mxu0 0.0
    %602 = vmatprep.subr.mxu0 0.0
    %603 = vmatpush1.xpose.msra.mxu0 0.0
    %604 = vmatprep.subr.mxu0 0.0
    %605 = vmatpush1.xpose.msra.mxu0 0.0
    %606 = vmatprep.subr.mxu0 0.0
    %607 = vmatpush1.xpose.msra.mxu0 0.0
    %608 = vmatprep.subr.mxu0 0.0
    %609 = vmatpush1.xpose.msra.mxu0 0.0
    %610 = vmatprep.subr.mxu0 0.0
    %611 = vmatpush1.xpose.msra.mxu0 0.0
    %612 = vmatprep.mubr.f32.mxu0 0.0
    %613 = vmatmul.mubr.f32.gmra.mrb[0].mxu0 %v540
    %v614 = vpop.f32.mrb[0].mxu0
    %v615 = vadd.f32 0.0, %v614
    %v616 = vpop.f32.mrb[0].mxu0
    %617 = vdwg.mxu0
    %v618 = vmul.f32 %v532, %v537
    %620 = vset.pattern.permute.xlu0 17
    %621 = vperm.xlu0 %620, %v618
    %v622 = vpop.permute.xlu0 %621
    %v624 = vadd.f32 %v615, %v622
    %v625 = vmul.f32 %v532, 2.0
    %627 = vset.pattern.permute.xlu0 17
    %628 = vperm.xlu0 %627, %v625
    %v629 = vpop.permute.xlu0 %628
    %v631 = vmul.f32 %v629, %v615
    %v632 = vlaneseq
    %v633 = vshrl.u32 %v632, 7
    %v634 = vsub.s32 0, %v633
    %v635 = vrot.slane %v455, %v634
    %v636 = vadd.f32 %v635, %v631
    %v637 = vmul.f32 %v532, %v532
    %v638 = vmul.f32 %v637, %v537
    %640 = vset.pattern.permute.xlu0 17
    %641 = vperm.xlu0 %640, %v638
    %v642 = vpop.permute.xlu0 %641
    %v644 = vadd.f32 %v636, %v642
    %v645 = vadd.f32 %v537, 1e-08
    %v646 = vrsqrt.pop %v645
    %v647 = vmul.f32 %v624, %v646
    %v648 = vadd.f32 %v644, 1e-08
    %v649 = vrsqrt.pop %v648
    %v650 = vmul.f32 %v647, %v649
    %652 = vset.pattern.permute.xlu0 16
    %653 = vperm.xlu0 %652, %v526
    %v654 = vpop.permute.xlu0 %653
    %v656 = vmul.f32 %v654, %v650
    %v657 = vsel %vm534, %v656, -inf
    %658 = vmax.xlane.f32.xlu0 %v657
    %v659 = vpop.xlane.xlu0 %658
    %v660 = vsub.f32 %v656, %v659
    %v661 = vmul.f32 %v660, 1.442695
    %v662 = vpow.pop %v661
    %v663 = vsel %vm534, %v662, 0.0
    %664 = vadd.xlane.f32.xlu0 %v663
    %v665 = vpop.xlane.xlu0 %664
    %v666 = vrcp.pop %v665
    %v667 = vmul.f32 %v662, %v666
    %v668 = vsel %vm534, %v667, 0.0
    %669 = vadd.xlane.f32.xlu0 %v668
    %v670 = vpop.xlane.xlu0 %669
    %v671 = vmul.f32 %v670, %v532
    %673 = vset.pattern.permute.xlu0 17
    %674 = vperm.xlu0 %673, %v671
    %v675 = vpop.permute.xlu0 %674
    %v677 = vmul.f32 %v675, %v517
    %v679 = vsel %vm538, %v667, 0
    %681 = vmatprep.subr.mxu0 0.0
    %682 = vmatpush1.msra.mxu0 %v453
    %683 = vmatprep.subr.mxu0 0.0
    %684 = vmatpush1.msra.mxu0 %v454
    %685 = vmatprep.subr.mxu0 0.0
    %686 = vmatpush1.msra.mxu0 0.0
    %687 = vmatprep.subr.mxu0 0.0
    %688 = vmatpush1.msra.mxu0 0.0
    %689 = vmatprep.subr.mxu0 0.0
    %690 = vmatpush1.msra.mxu0 0.0
    %691 = vmatprep.subr.mxu0 0.0
    %692 = vmatpush1.msra.mxu0 0.0
    %693 = vmatprep.subr.mxu0 0.0
    %694 = vmatpush1.msra.mxu0 0.0
    %695 = vmatprep.subr.mxu0 0.0
    %696 = vmatpush1.msra.mxu0 0.0
    %697 = vmatprep.subr.mxu0 0.0
    %698 = vmatpush1.msra.mxu0 0.0
    %699 = vmatprep.subr.mxu0 0.0
    %700 = vmatpush1.msra.mxu0 0.0
    %701 = vmatprep.subr.mxu0 0.0
    %702 = vmatpush1.msra.mxu0 0.0
    %703 = vmatprep.subr.mxu0 0.0
    %704 = vmatpush1.msra.mxu0 0.0
    %705 = vmatprep.subr.mxu0 0.0
    %706 = vmatpush1.msra.mxu0 0.0
    %707 = vmatprep.subr.mxu0 0.0
    %708 = vmatpush1.msra.mxu0 0.0
    %709 = vmatprep.subr.mxu0 0.0
    %710 = vmatpush1.msra.mxu0 0.0
    %711 = vmatprep.subr.mxu0 0.0
    %712 = vmatpush1.msra.mxu0 0.0
    %713 = vmatprep.subr.mxu0 0.0
    %714 = vmatpush1.msra.mxu0 0.0
    %715 = vmatprep.subr.mxu0 0.0
    %716 = vmatpush1.msra.mxu0 0.0
    %717 = vmatprep.subr.mxu0 0.0
    %718 = vmatpush1.msra.mxu0 0.0
    %719 = vmatprep.subr.mxu0 0.0
    %720 = vmatpush1.msra.mxu0 0.0
    %721 = vmatprep.subr.mxu0 0.0
    %722 = vmatpush1.msra.mxu0 0.0
    %723 = vmatprep.subr.mxu0 0.0
    %724 = vmatpush1.msra.mxu0 0.0
    %725 = vmatprep.subr.mxu0 0.0
    %726 = vmatpush1.msra.mxu0 0.0
    %727 = vmatprep.subr.mxu0 0.0
    %728 = vmatpush1.msra.mxu0 0.0
    %729 = vmatprep.subr.mxu0 0.0
    %730 = vmatpush1.msra.mxu0 0.0
    %731 = vmatprep.subr.mxu0 0.0
    %732 = vmatpush1.msra.mxu0 0.0
    %733 = vmatprep.subr.mxu0 0.0
    %734 = vmatpush1.msra.mxu0 0.0
    %735 = vmatprep.subr.mxu0 0.0
    %736 = vmatpush1.msra.mxu0 0.0
    %737 = vmatprep.subr.mxu0 0.0
    %738 = vmatpush1.msra.mxu0 0.0
    %739 = vmatprep.subr.mxu0 0.0
    %740 = vmatpush1.msra.mxu0 0.0
    %741 = vmatprep.subr.mxu0 0.0
    %742 = vmatpush1.msra.mxu0 0.0
    %743 = vmatprep.subr.mxu0 0.0
    %744 = vmatpush1.msra.mxu0 0.0
    %745 = vmatprep.mubr.f32.mxu0 0.0
    %746 = vmatmul.mubr.f32.gmra.mrb[0].mxu0 %v679
    %v747 = vpop.f32.mrb[0].mxu0
    %v748 = vadd.f32 %v677, %v747
    %v749 = vpop.f32.mrb[0].mxu0
    %750 = vdwg.mxu0
    %v751 = vpack.c.bf16 %v748, %v748
    %v752 = vld [vmem:[%s4 + $0x10] sm:$0xf]
    %v753 = vld [vmem:[%s4 + $0x14] sm:$0xf]
    %v756 = vunpack.c.l.b16 %v752
    %v757 = vunpack.c.l.b16 %v753
    %v758 = vpack.c.b16 %v757, %v756
    %v761 = vsel %vm538, %v751, 0
    %763 = vmatprep.subr.bf16.mxu0 0
    %764 = vmatpush1.bf16.msra.mxu0 %v758
    %765 = vmatprep.subr.bf16.mxu0 0
    %766 = vmatpush1.bf16.msra.mxu0 0
    %767 = vmatprep.subr.bf16.mxu0 0
    %768 = vmatpush1.bf16.msra.mxu0 0
    %769 = vmatprep.subr.bf16.mxu0 0
    %770 = vmatpush1.bf16.msra.mxu0 0
    %771 = vmatprep.subr.bf16.mxu0 0
    %772 = vmatpush1.bf16.msra.mxu0 0
    %773 = vmatprep.subr.bf16.mxu0 0
    %774 = vmatpush1.bf16.msra.mxu0 0
    %775 = vmatprep.subr.bf16.mxu0 0
    %776 = vmatpush1.bf16.msra.mxu0 0
    %777 = vmatprep.subr.bf16.mxu0 0
    %778 = vmatpush1.bf16.msra.mxu0 0
    %779 = vmatprep.subr.bf16.mxu0 0
    %780 = vmatpush1.bf16.msra.mxu0 0
    %781 = vmatprep.subr.bf16.mxu0 0
    %782 = vmatpush1.bf16.msra.mxu0 0
    %783 = vmatprep.subr.bf16.mxu0 0
    %784 = vmatpush1.bf16.msra.mxu0 0
    %785 = vmatprep.subr.bf16.mxu0 0
    %786 = vmatpush1.bf16.msra.mxu0 0
    %787 = vmatprep.subr.bf16.mxu0 0
    %788 = vmatpush1.bf16.msra.mxu0 0
    %789 = vmatprep.subr.bf16.mxu0 0
    %790 = vmatpush1.bf16.msra.mxu0 0
    %791 = vmatprep.subr.bf16.mxu0 0
    %792 = vmatpush1.bf16.msra.mxu0 0
    %793 = vmatprep.subr.bf16.mxu0 0
    %794 = vmatpush1.bf16.msra.mxu0 0
    %795 = vmatprep.mubr.bf16.mxu0 0
    %796 = vmatmul.mubr.bf16.gmra.mrb[0].mxu0 %v761
    %v797 = vpop.f32.mrb[0].mxu0
    %v798 = vadd.f32 0.0, %v797
    %v799 = vpop.f32.mrb[0].mxu0
    %v800 = vpop.f32.mrb[0].mxu0
    %v801 = vpop.f32.mrb[0].mxu0
    %802 = vdwg.mxu0
    %v803 = vadd.f32 %v448, %v798
    %v804 = vmul.f32 %v803, 0.5
    %v805 = vtanh.pop %v804
    %v806 = vmul.f32 %v805, 0.5
    %v807 = vadd.f32 %v806, 0.5
    %808 = vst [vmem:[#allocation5] sm:$0x3] %v807
    // Predicated region
    $region30: #{one_shot_classifier_reduce_forward.1} parent=1 // pred_check
      _
    $region31: #{one_shot_classifier_reduce_forward.1} parent=1 // pred_check_branch
      %810 = sbr.rel (0) target = $region33
    $region32: #{one_shot_classifier_reduce_forward.1} parent=1 // pred_region
      %s812 = ssub.s32 32, 32
      %813 = vsyncadd [#allocation4], %s812
      %s815 = sshll.u32 [#allocation5], 4
      %s816 = int_to_ptr.vmem [resolvable:$true] %s815
      %818 = dma.vmem_to_hbm [thread:$0]  %s816, 32, %s6, [#allocation4]
    $region33: #{one_shot_classifier_reduce_forward.1} parent=1 // pred_fallthru
      _
    // Predicated region
    $region34: #{one_shot_classifier_reduce_forward.1} parent=1 // pred_check
      _
    $region35: #{one_shot_classifier_reduce_forward.1} parent=1 // pred_check_branch
      %820 = sbr.rel (0) target = $region37
    $region36: #{one_shot_classifier_reduce_forward.1} parent=1 // pred_region
      %821 = dma.done [#allocation4], 32
    $region37: #{one_shot_classifier_reduce_forward.1} parent=1 // pred_fallthru
      _
    %822 = vsyncpa [#allocation3], 1
    %823 = vsyncpa [#allocation4], 1

</llo_original>
